<compile_context>
chip_gen: v7x
topology: tpu7x:2x2x1
jax: 0.10.0
libtpu: 0.0.40
codegen_flags: <defaults>
</compile_context>

<pallas_src>
import functools
import math

import jax
import jax.numpy as jnp
from jax.experimental import pallas as pl
from jax.experimental.pallas import tpu as pltpu

_VMEM_LIMIT = 32 * 1024 * 1024   # raises v5e's 16 MiB scoped default; == default on v6e/v7x
_NEG_INF = -1e30                 # mask value (avoids -inf - -inf NaNs in the online softmax)


# ----------------------------------------------------------------------------
# small helpers
# ----------------------------------------------------------------------------
def _round_up(x, m):
    return ((x + m - 1) // m) * m


def _pick_tile(dim, target, align):
    """Largest tile <= target that evenly divides `dim` and is a multiple of `align`;
    falls back to the full dim (a single full block, always legal) if none exists."""
    if dim <= target:
        return dim
    t = (target // align) * align
    while t >= align:
        if dim % t == 0:
            return t
        t -= align
    return dim


# ----------------------------------------------------------------------------
# kernels
# ----------------------------------------------------------------------------
def _matmul_bias_kernel(x_ref, w_ref, b_ref, o_ref, acc_ref):
    """out = x @ w + b; grid (M/tm, N/tn, K/tk), K innermost ("arbitrary"),
    f32 VMEM accumulator with pl.when init / finalize."""
    k = pl.program_id(2)

    @pl.when(k == 0)
    def _():
        acc_ref[...] = jnp.zeros(acc_ref.shape, acc_ref.dtype)

    acc_ref[...] += jnp.dot(x_ref[...], w_ref[...],
                            preferred_element_type=jnp.float32)

    @pl.when(k == pl.num_programs(2) - 1)
    def _():
        r = acc_ref[...] + b_ref[...].astype(jnp.float32)
        o_ref[...] = r.astype(o_ref.dtype)


def _dense_ln_residual_kernel(x_ref, w_ref, b_ref, g_ref, bt_ref, res_ref,
                              o_ref, acc_ref, *, eps):
    """out = residual + LayerNorm(x @ w + b); the full hidden width N stays lane-resident
    so the LN row reduction sees the whole row.  grid (M/tm, K/tk), K innermost."""
    k = pl.program_id(1)

    @pl.when(k == 0)
    def _():
        acc_ref[...] = jnp.zeros(acc_ref.shape, acc_ref.dtype)

    acc_ref[...] += jnp.dot(x_ref[...], w_ref[...],
                            preferred_element_type=jnp.float32)

    @pl.when(k == pl.num_programs(1) - 1)
    def _():
        y = acc_ref[...] + b_ref[...].astype(jnp.float32)
        mu = jnp.mean(y, axis=-1, keepdims=True)
        var = jnp.mean(jnp.square(y - mu), axis=-1, keepdims=True)  # biased (torch LN)
        y = (y - mu) * jax.lax.rsqrt(var + eps)
        y = y * g_ref[...].astype(jnp.float32) + bt_ref[...].astype(jnp.float32)
        o_ref[...] = (res_ref[...].astype(jnp.float32) + y).astype(o_ref.dtype)


def _mlp_ln_residual_kernel(x_ref, w1_ref, b1_ref, w2_ref, b2_ref, g_ref, bt_ref,
                            o_ref, acc_ref, *, eps, approx_gelu):
    """out = x + LayerNorm(fc2(GELU(fc1(x)))), intermediate dim I as the reduction grid axis:
    per step  t = GELU(x_panel @ w1_tile + b1_tile);  acc += t @ w2_tile.
    The (M, I) GELU activation never touches HBM.  x doubles as the residual (same block)."""
    j = pl.program_id(1)

    @pl.when(j == 0)
    def _():
        acc_ref[...] = jnp.zeros(acc_ref.shape, acc_ref.dtype)

    t = jnp.dot(x_ref[...], w1_ref[...], preferred_element_type=jnp.float32)
    t = t + b1_ref[...].astype(jnp.float32)
    t = jax.nn.gelu(t, approximate=approx_gelu)          # exact erf GELU by default (f32)
    acc_ref[...] += jnp.dot(t.astype(x_ref.dtype), w2_ref[...],
                            preferred_element_type=jnp.float32)

    @pl.when(j == pl.num_programs(1) - 1)
    def _():
        y = acc_ref[...] + b2_ref[...].astype(jnp.float32)
        mu = jnp.mean(y, axis=-1, keepdims=True)
        var = jnp.mean(jnp.square(y - mu), axis=-1, keepdims=True)
        y = (y - mu) * jax.lax.rsqrt(var + eps)
        y = y * g_ref[...].astype(jnp.float32) + bt_ref[...].astype(jnp.float32)
        o_ref[...] = (x_ref[...].astype(jnp.float32) + y).astype(o_ref.dtype)


def _flash_attn_kernel(q_ref, k_ref, v_ref, o_ref, m_sc, l_sc, acc_sc, *,
                       scale, seq_len, block_kv, needs_mask):
    """One (batch, head, q-tile); KV tiles streamed along the innermost ("arbitrary") axis
    with an online-softmax accumulator.  Padded KV positions (>= seq_len) are masked."""
    ki = pl.program_id(3)

    @pl.when(ki == 0)
    def _():
        m_sc[...] = jnp.full(m_sc.shape, _NEG_INF, m_sc.dtype)
        l_sc[...] = jnp.zeros(l_sc.shape, l_sc.dtype)
        acc_sc[...] = jnp.zeros(acc_sc.shape, acc_sc.dtype)

    q = q_ref[...] * scale                  # scale folded into q: bq x Dh once per q tile
    k = k_ref[...]
    v = v_ref[...]

    # Contract the last (head_dim) axis of both operands: no k.T / XLU transpose.
    s = jax.lax.dot_general(q, k, (((1,), (1,)), ((), ())),
                            preferred_element_type=jnp.float32)        # (bq, bkv)
    if needs_mask:
        col = ki * block_kv + jax.lax.broadcasted_iota(jnp.int32, s.shape, 1)
        s = jnp.where(col < seq_len, s, _NEG_INF)

    m_prev = m_sc[...]
    m_new = jnp.maximum(m_prev, jnp.max(s, axis=-1, keepdims=True))
    alpha = jnp.exp(m_prev - m_new)
    p = jnp.exp(s - m_new)
    l_sc[...] = alpha * l_sc[...] + jnp.sum(p, axis=-1, keepdims=True)
    acc_sc[...] = alpha * acc_sc[...] + jnp.dot(
        p.astype(v.dtype), v, preferred_element_type=jnp.float32)
    m_sc[...] = m_new

    @pl.when(ki == pl.num_programs(3) - 1)
    def _():
        inv_l = pl.reciprocal(l_sc[...], approx=False)   # (bq, 1): exactness is free here
        o_ref[...] = (acc_sc[...] * inv_l).astype(o_ref.dtype)


# ----------------------------------------------------------------------------
# pallas_call wrappers
# ----------------------------------------------------------------------------
def _matmul_bias(x, w, b, *, block_m, block_n, block_k):
    M, K = x.shape
    _, N = w.shape
    tm = _pick_tile(M, block_m, 8)
    tn = _pick_tile(N, block_n, 128)
    tk = _pick_tile(K, block_k, 128)
    grid = (M // tm, N // tn, K // tk)
    return pl.pallas_call(
        _matmul_bias_kernel,
        out_shape=jax.ShapeDtypeStruct((M, N), x.dtype),
        grid_spec=pltpu.PrefetchScalarGridSpec(
            num_scalar_prefetch=0,
            grid=grid,
            in_specs=[
                pl.BlockSpec((tm, tk), lambda i, j, k: (i, k)),
                pl.BlockSpec((tk, tn), lambda i, j, k: (k, j)),
                pl.BlockSpec((1, tn), lambda i, j, k: (0, j)),
            ],
            out_specs=pl.BlockSpec((tm, tn), lambda i, j, k: (i, j)),
            scratch_shapes=[pltpu.VMEM((tm, tn), jnp.float32)],
        ),
        compiler_params=pltpu.CompilerParams(
            dimension_semantics=("parallel", "parallel", "arbitrary"),
            vmem_limit_bytes=_VMEM_LIMIT),
    )(x, w, b)


def _dense_ln_residual(x, w, b, gamma, beta, residual, *, eps, block_m, block_k):
    M, K = x.shape
    _, N = w.shape
    tm = _pick_tile(M, block_m, 8)
    tk = _pick_tile(K, block_k, 128)
    grid = (M // tm, K // tk)
    return pl.pallas_call(
        functools.partial(_dense_ln_residual_kernel, eps=eps),
        out_shape=jax.ShapeDtypeStruct((M, N), x.dtype),
        grid_spec=pltpu.PrefetchScalarGridSpec(
            num_scalar_prefetch=0,
            grid=grid,
            in_specs=[
                pl.BlockSpec((tm, tk), lambda i, k: (i, k)),
                pl.BlockSpec((tk, N), lambda i, k: (k, 0)),
                pl.BlockSpec((1, N), lambda i, k: (0, 0)),
                pl.BlockSpec((1, N), lambda i, k: (0, 0)),
                pl.BlockSpec((1, N), lambda i, k: (0, 0)),
                pl.BlockSpec((tm, N), lambda i, k: (i, 0)),
            ],
            out_specs=pl.BlockSpec((tm, N), lambda i, k: (i, 0)),
            scratch_shapes=[pltpu.VMEM((tm, N), jnp.float32)],
        ),
        compiler_params=pltpu.CompilerParams(
            dimension_semantics=("parallel", "arbitrary"),
            vmem_limit_bytes=_VMEM_LIMIT),
    )(x, w, b, gamma, beta, residual)


def _mlp_ln_residual(x, w1, b1, w2, b2, gamma, beta, *, eps, approx_gelu,
                     block_m, block_i):
    M, D = x.shape
    _, I = w1.shape
    tm = _pick_tile(M, block_m, 8)
    ti = _pick_tile(I, block_i, 128)
    grid = (M // tm, I // ti)
    return pl.pallas_call(
        functools.partial(_mlp_ln_residual_kernel, eps=eps, approx_gelu=approx_gelu),
        out_shape=jax.ShapeDtypeStruct((M, D), x.dtype),
        grid_spec=pltpu.PrefetchScalarGridSpec(
            num_scalar_prefetch=0,
            grid=grid,
            in_specs=[
                pl.BlockSpec((tm, D), lambda i, j: (i, 0)),   # x (also the residual)
                pl.BlockSpec((D, ti), lambda i, j: (0, j)),   # w1
                pl.BlockSpec((1, ti), lambda i, j: (0, j)),   # b1
                pl.BlockSpec((ti, D), lambda i, j: (j, 0)),   # w2
                pl.BlockSpec((1, D), lambda i, j: (0, 0)),    # b2
                pl.BlockSpec((1, D), lambda i, j: (0, 0)),    # ln gamma
                pl.BlockSpec((1, D), lambda i, j: (0, 0)),    # ln beta
            ],
            out_specs=pl.BlockSpec((tm, D), lambda i, j: (i, 0)),
            scratch_shapes=[pltpu.VMEM((tm, D), jnp.float32)],
        ),
        compiler_params=pltpu.CompilerParams(
            dimension_semantics=("parallel", "arbitrary"),
            vmem_limit_bytes=_VMEM_LIMIT),
    )(x, w1, b1, w2, b2, gamma, beta)


def _flash_attention(qkv, *, num_heads, head_dim, seq_len, scale, bq, bkv):
    """qkv: (B, Lp, 3*H*Dh) fused projection output (column layout [q_h0..q_hH, k_..., v_...],
    head_dim padded to a multiple of 128).  Returns ctx in (B, Lp, H*Dh) layout -- i.e. the
    `transpose(1,2).view(B, L, -1)` layout -- so the wrapper reshape is free."""
    B, Lp, _ = qkv.shape
    H, Dh = num_heads, head_dim
    grid = (B, H, Lp // bq, Lp // bkv)
    kernel = functools.partial(_flash_attn_kernel, scale=scale, seq_len=seq_len,
                               block_kv=bkv, needs_mask=(seq_len < Lp))
    return pl.pallas_call(
        kernel,
        out_shape=jax.ShapeDtypeStruct((B, Lp, H * Dh), qkv.dtype),
        grid_spec=pltpu.PrefetchScalarGridSpec(
            num_scalar_prefetch=0,
            grid=grid,
            in_specs=[
                # q / k / v are different column-blocks of the same fused qkv array.
                pl.BlockSpec((None, bq, Dh), lambda b, h, qi, ki: (b, qi, h)),
                pl.BlockSpec((None, bkv, Dh), lambda b, h, qi, ki: (b, ki, H + h)),
                pl.BlockSpec((None, bkv, Dh), lambda b, h, qi, ki: (b, ki, 2 * H + h)),
            ],
            out_specs=pl.BlockSpec((None, bq, Dh), lambda b, h, qi, ki: (b, qi, h)),
            scratch_shapes=[
                pltpu.VMEM((bq, 1), jnp.float32),    # running max m
                pltpu.VMEM((bq, 1), jnp.float32),    # running denom l
                pltpu.VMEM((bq, Dh), jnp.float32),   # running numerator acc
            ],
        ),
        compiler_params=pltpu.CompilerParams(
            dimension_semantics=("parallel", "parallel", "parallel", "arbitrary"),
            vmem_limit_bytes=_VMEM_LIMIT),
    )(qkv, qkv, qkv)


# ----------------------------------------------------------------------------
# TransformerLayer forward (wrapper composing the Pallas kernels)
# ----------------------------------------------------------------------------
def transformer_layer(x, params, *, num_heads, eps=1e-5,
                      block_m=512, block_n=1024, block_k=512,
                      block_m_ln=256, block_i=512,
                      block_q=256, block_kv=512,
                      approx_gelu=False):
    """x: (B, L, D). Linear weights are stored (in, out), i.e. pre-transposed relative to
    PyTorch. Matmul operands run in x.dtype (pass bf16 for the v6e/v7x MXU fast path);
    accumulation / softmax / GELU / LayerNorm are f32."""
    B, L, D = x.shape
    H = num_heads
    Dh = D // H
    Dh_p = Dh if Dh % 128 == 0 else _round_up(Dh, 128)   # lane-dense head dim (exact padding)
    cdt = x.dtype

    # --- sequence padding so every kernel stays tiled at the odd EVA2CLIP lengths ----------
    if L <= max(block_q, block_kv):
        Lp = _round_up(L, 8)
        bq = bkv = Lp
    else:
        Lp = _round_up(L, math.lcm(block_q, block_kv))
        bq, bkv = block_q, block_kv
    if Lp != L:
        x = jnp.pad(x, ((0, 0), (0, Lp - L), (0, 0)))
    x2d = x.reshape(B * Lp, D)

    # --- weights: pad head_dim with zero columns/rows (exact), cast big matrices to the
    #     compute dtype; biases / LN gamma,beta stay f32 (upcast in-kernel anyway) ----------
    wqkv, bqkv, wd = params["wqkv"], params["bqkv"], params["wd"]
    if Dh_p != Dh:
        wqkv = jnp.pad(wqkv.reshape(D, 3, H, Dh),
                       ((0, 0), (0, 0), (0, 0), (0, Dh_p - Dh))).reshape(D, 3 * H * Dh_p)
        bqkv = jnp.pad(bqkv.reshape(1, 3, H, Dh),
                       ((0, 0), (0, 0), (0, 0), (0, Dh_p - Dh))).reshape(1, 3 * H * Dh_p)
        wd = jnp.pad(wd.reshape(H, Dh, D),
                     ((0, 0), (0, Dh_p - Dh), (0, 0))).reshape(H * Dh_p, D)
    wqkv = wqkv.astype(cdt)
    wd = wd.astype(cdt)
    w1 = params["w1"].astype(cdt)
    w2 = params["w2"].astype(cdt)

    # --- fused q/k/v projection: one tiled matmul, x read from HBM once --------------------
    qkv2d = _matmul_bias(x2d, wqkv, bqkv,
                         block_m=block_m, block_n=block_n, block_k=block_k)
    qkv3d = qkv2d.reshape(B, Lp, 3 * H * Dh_p)            # free reshape

    # --- flash attention reading q/k/v straight out of the fused projection (no transposes)
    ctx = _flash_attention(qkv3d, num_heads=H, head_dim=Dh_p, seq_len=L,
                           scale=1.0 / math.sqrt(Dh), bq=bq, bkv=bkv)
    ctx2d = ctx.reshape(B * Lp, H * Dh_p)                  # free reshape

    # --- h = x + LayerNorm(dense(ctx))   (attention output proj + input_layernorm) ---------
    h1 = _dense_ln_residual(ctx2d, wd, params["bd"], params["ln1_w"], params["ln1_b"],
                            x2d, eps=eps, block_m=block_m_ln, block_k=block_k)

    # --- out = h + LayerNorm(fc2(GELU(fc1(h))))   (fused MLP + post_attention_layernorm) ---
    out2d = _mlp_ln_residual(h1, w1, params["b1"], w2, params["b2"],
                             params["ln2_w"], params["ln2_b"], eps=eps,
                             approx_gelu=approx_gelu, block_m=block_m_ln, block_i=block_i)

    out = out2d.reshape(B, Lp, D)
    if Lp != L:
        out = out[:, :L]
    return out


# ----------------------------------------------------------------------------
# synthetic parameters + pure-JAX reference
# ----------------------------------------------------------------------------
def make_params(key, hidden_size, intermediate_size):
    """Deterministic synthetic weights. Linear weights stored (in, out)."""
    ks = jax.random.split(key, 8)
    s = 0.02
    D, I = hidden_size, intermediate_size
    return {
        "wqkv": s * jax.random.normal(ks[0], (D, 3 * D), jnp.float32),
        "bqkv": s * jax.random.normal(ks[1], (1, 3 * D), jnp.float32),
        "wd":   s * jax.random.normal(ks[2], (D, D), jnp.float32),
        "bd":   s * jax.random.normal(ks[3], (1, D), jnp.float32),
        "ln1_w": jnp.ones((1, D), jnp.float32),
        "ln1_b": jnp.zeros((1, D), jnp.float32),
        "w1":   s * jax.random.normal(ks[4], (D, I), jnp.float32),
        "b1":   s * jax.random.normal(ks[5], (1, I), jnp.float32),
        "w2":   s * jax.random.normal(ks[6], (I, D), jnp.float32),
        "b2":   s * jax.random.normal(ks[7], (1, D), jnp.float32),
        "ln2_w": jnp.ones((1, D), jnp.float32),
        "ln2_b": jnp.zeros((1, D), jnp.float32),
    }


def reference_transformer_layer(x, p, *, num_heads, eps=1e-5):
    """Pure-JAX reference mirroring the PyTorch forward exactly (f32)."""
    B, L, D = x.shape
    Dh = D // num_heads

    def ln(y, w, b):
        mu = y.mean(-1, keepdims=True)
        var = ((y - mu) ** 2).mean(-1, keepdims=True)
        return (y - mu) / jnp.sqrt(var + eps) * w + b

    qkv = x @ p["wqkv"] + p["bqkv"]
    qkv = qkv.reshape(B, L, 3, num_heads, Dh).transpose(2, 0, 3, 1, 4)
    q, k, v = qkv[0], qkv[1], qkv[2]                       # (B, H, L, Dh)
    s = jnp.einsum("bhld,bhmd->bhlm", q / math.sqrt(Dh), k)
    a = jax.nn.softmax(s, axis=-1)
    ctx = jnp.einsum("bhlm,bhmd->bhld", a, v)
    ctx = ctx.transpose(0, 2, 1, 3).reshape(B, L, D)
    attn_out = ctx @ p["wd"] + p["bd"]
    h1 = x + ln(attn_out, p["ln1_w"], p["ln1_b"])
    m = jax.nn.gelu(h1 @ p["w1"] + p["b1"], approximate=False)
    m = m @ p["w2"] + p["b2"]
    return h1 + ln(m, p["ln2_w"], p["ln2_b"])


# ----------------------------------------------------------------------------
# main
# ----------------------------------------------------------------------------
if __name__ == "__main__":
    eps = 1e-5
    root = jax.random.PRNGKey(0)
    kx1, kp1, kx2, kp2 = jax.random.split(root, 4)

    # --- test 1: tiny f32 shapes, odd L (exercises seq padding + kv masking + Dh padding) --
    B, L, D, H, I = 2, 9, 32, 4, 64
    x = jax.random.normal(kx1, (B, L, D), jnp.float32)
    params = make_params(kp1, D, I)

    out = jax.block_until_ready(transformer_layer(x, params, num_heads=H, eps=eps))
    ref = reference_transformer_layer(x, params, num_heads=H, eps=eps)
    assert out.shape == (B, L, D)
    err = float(jnp.max(jnp.abs(out - ref)))
    assert err < 5e-3, f"f32 max abs err = {err}"

    # --- test 2: bf16 operands, odd L > tile sizes -> multi-tile grids on every kernel -----
    B2, L2, D2, H2, I2 = 1, 513, 256, 2, 1024
    x2 = jax.random.normal(kx2, (B2, L2, D2), jnp.float32)
    params2 = make_params(kp2, D2, I2)

    out2 = transformer_layer(x2.astype(jnp.bfloat16), params2, num_heads=H2, eps=eps,
                             block_m=256, block_n=512, block_k=128,
                             block_m_ln=128, block_i=512,
                             block_q=128, block_kv=256)
    out2 = jax.block_until_ready(out2).astype(jnp.float32)
    ref2 = reference_transformer_layer(x2, params2, num_heads=H2, eps=eps)
    assert out2.shape == (B2, L2, D2)
    assert bool(jnp.all(jnp.isfinite(out2)))
    err2 = float(jnp.max(jnp.abs(out2 - ref2)))
    assert err2 < 0.3, f"bf16 max abs err = {err2}"   # bf16 operand smoke check

    print("KERNEL_OK")
</pallas_src>

<mosaic_0001>
module attributes {stable_mosaic.version = 11 : i64} {
  func.func @_matmul_bias_kernel(%arg0: i32, %arg1: i32, %arg2: i32, %arg3: memref<32x32xf32, #tpu.memory_space<vmem>>, %arg4: memref<32x768xf32, #tpu.memory_space<vmem>>, %arg5: memref<1x768xf32, #tpu.memory_space<vmem>>, %arg6: memref<32x768xf32, #tpu.memory_space<vmem>>, %arg7: memref<32x768xf32, #tpu.memory_space<vmem>>) attributes {dimension_semantics = [#tpu.dimension_semantics<parallel>, #tpu.dimension_semantics<parallel>, #tpu.dimension_semantics<arbitrary>], iteration_bounds = array<i64: 1, 2, 1>, scalar_prefetch = 0 : i64, scratch_operands = 1 : i64, tpu.core_type = #tpu.core_type<tc>, window_params = [{transform_indices = @transform_0, window_bounds = array<i64: 32, 32>}, {transform_indices = @transform_1, window_bounds = array<i64: 32, 768>}, {transform_indices = @transform_2, window_bounds = array<i64: 1, 768>}, {transform_indices = @transform_3, window_bounds = array<i64: 32, 768>}]} {
    %c0_i32 = arith.constant 0 : i32
    %0 = arith.cmpi eq, %arg2, %c0_i32 : i32
    %1 = arith.extui %0 : i1 to i32
    %c0_i32_0 = arith.constant 0 : i32
    %2 = arith.cmpi ne, %1, %c0_i32_0 : i32
    scf.if %2 {
      %cst_10 = arith.constant 0.000000e+00 : f32
      %12 = vector.broadcast %cst_10 : f32 to vector<32x768xf32>
      %c0_11 = arith.constant 0 : index
      %c0_12 = arith.constant 0 : index
      %13 = vector.load %arg7[%c0_11, %c0_12] : memref<32x768xf32, #tpu.memory_space<vmem>>, vector<32x768xf32>
      tpu.vector_store %arg7[%c0_11, %c0_12], %12 {strides = array<i32>} : memref<32x768xf32, #tpu.memory_space<vmem>>, vector<32x768xf32>,
    } else {
    }
    %c0 = arith.constant 0 : index
    %c0_1 = arith.constant 0 : index
    %3 = vector.load %arg7[%c0, %c0_1] : memref<32x768xf32, #tpu.memory_space<vmem>>, vector<32x768xf32>
    %c0_2 = arith.constant 0 : index
    %c0_3 = arith.constant 0 : index
    %4 = vector.load %arg3[%c0_2, %c0_3] : memref<32x32xf32, #tpu.memory_space<vmem>>, vector<32x32xf32>
    %c0_4 = arith.constant 0 : index
    %c0_5 = arith.constant 0 : index
    %5 = vector.load %arg4[%c0_4, %c0_5] : memref<32x768xf32, #tpu.memory_space<vmem>>, vector<32x768xf32>
    %cst = arith.constant dense<0.000000e+00> : vector<32x768xf32>
    %6 = tpu.matmul %4, %5, %cst {dimension_numbers = #tpu.dot_dimension_numbers<[1], [0], [0], [1], [0, 0, 1, 1], [], []>} : vector<32x32xf32>, vector<32x768xf32>, vector<32x768xf32> -> vector<32x768xf32>
    %7 = arith.addf %3, %6 : vector<32x768xf32>
    %c0_6 = arith.constant 0 : index
    %c0_7 = arith.constant 0 : index
    %8 = vector.load %arg7[%c0_6, %c0_7] : memref<32x768xf32, #tpu.memory_space<vmem>>, vector<32x768xf32>
    tpu.vector_store %arg7[%c0_6, %c0_7], %7 {strides = array<i32>} : memref<32x768xf32, #tpu.memory_space<vmem>>, vector<32x768xf32>,
    %c0_i32_8 = arith.constant 0 : i32
    %9 = arith.cmpi eq, %arg2, %c0_i32_8 : i32
    %10 = arith.extui %9 : i1 to i32
    %c0_i32_9 = arith.constant 0 : i32
    %11 = arith.cmpi ne, %10, %c0_i32_9 : i32
    scf.if %11 {
      %c0_10 = arith.constant 0 : index
      %c0_11 = arith.constant 0 : index
      %12 = vector.load %arg7[%c0_10, %c0_11] : memref<32x768xf32, #tpu.memory_space<vmem>>, vector<32x768xf32>
      %c0_12 = arith.constant 0 : index
      %c0_13 = arith.constant 0 : index
      %13 = vector.load %arg5[%c0_12, %c0_13] : memref<1x768xf32, #tpu.memory_space<vmem>>, vector<1x768xf32>
      %14 = vector.broadcast %13 : vector<1x768xf32> to vector<32x768xf32>
      %15 = arith.addf %12, %14 : vector<32x768xf32>
      %c0_14 = arith.constant 0 : index
      %c0_15 = arith.constant 0 : index
      %16 = vector.load %arg6[%c0_14, %c0_15] : memref<32x768xf32, #tpu.memory_space<vmem>>, vector<32x768xf32>
      tpu.vector_store %arg6[%c0_14, %c0_15], %15 {strides = array<i32>} : memref<32x768xf32, #tpu.memory_space<vmem>>, vector<32x768xf32>,
    } else {
    }
    return
  }
  func.func @transform_0(%arg0: i32, %arg1: i32, %arg2: i32) -> (i32, i32) {
    %c0_i32 = arith.constant 0 : i32
    return %arg0, %arg2 : i32, i32
  }
  func.func @transform_1(%arg0: i32, %arg1: i32, %arg2: i32) -> (i32, i32) {
    %c0_i32 = arith.constant 0 : i32
    return %arg2, %arg1 : i32, i32
  }
  func.func @transform_2(%arg0: i32, %arg1: i32, %arg2: i32) -> (i32, i32) {
    %c0_i32 = arith.constant 0 : i32
    %c0_i32_0 = arith.constant 0 : i32
    return %c0_i32, %arg1 : i32, i32
  }
  func.func @transform_3(%arg0: i32, %arg1: i32, %arg2: i32) -> (i32, i32) {
    %c0_i32 = arith.constant 0 : i32
    return %arg0, %arg1 : i32, i32
  }
}

</mosaic_0001>

<llo_original>
// kernel: tpu_custom_call.1
$region0: #{tpu_custom_call.1}
  #allocation0 [shape = 'u32[]', space=smem, size = 0x4, offset = 0x4, fixed_abs, tag = 'smem constant byte address 0x4 - core index']
  #allocation1 [shape = 'u32[144,128]{1,0:T(1,128)}', space=vmem, size = 0x12000, scoped, tag = 'internal scratch']
  #allocation2 [shape = 'f32[32,768]{1,0:T(8,128)}', space=vmem, size = 0x18000, scoped, tag = 'scratch operand']
  %s0 = inlined_call_operand.hbm [shape: f32[32,32], index: 0, kind: input, shape index: {}]
  %s1 = inlined_call_operand.hbm [shape: f32[32,1536], index: 1, kind: input, shape index: {}]
  %s2 = inlined_call_operand.hbm [shape: f32[1,1536], index: 2, kind: input, shape index: {}]
  %s3 = inlined_call_operand.hbm [shape: f32[32,1536], index: 3, kind: output, shape index: {}]
  %s4 = sld [smem:[#allocation0]]
  $region65: #{tpu_custom_call.1} parent=0
    _
  %s6 = ssub.s32 1, %s4
  %s7 = scalar_select 0, %s6, %s4
  $region1: #{tpu_custom_call.1} parent=0
    #allocation3 [shape = 'u8[16384]{0}', space=vmem, size = 0x4000, scoped, tag = 'input window, operand 0, single buffered']
    #allocation4 [shape = 's32[2]{0}', space=sflag, size = 0x8, scoped, tag = 'scoped memory for tpu_custom_call.1']
    #allocation5 [shape = 's32[2]{0}', space=sflag, size = 0x8, scoped, tag = 'scoped memory for tpu_custom_call.1']
    #allocation6 [shape = 'u8[196608]{0}', space=vmem, size = 0x30000, scoped, tag = 'input window, operand 1']
    #allocation7 [shape = 's32[2]{0}', space=sflag, size = 0x8, scoped, tag = 'scoped memory for tpu_custom_call.1']
    #allocation8 [shape = 'u8[6144]{0}', space=vmem, size = 0x1800, scoped, tag = 'input window, operand 2']
    #allocation9 [shape = 'u8[196608]{0}', space=vmem, size = 0x30000, scoped, tag = 'output window, operand 0']
    %8 = vsyncpa [#allocation4], 0
    %9 = vsyncpa [#allocation7], 0
    %s10 = scalar_lea.sflag [#allocation7], 1
    %11 = vsyncpa %s10, 0
    %12 = vsyncpa [#allocation5], 0
    %s13 = scalar_lea.sflag [#allocation5], 1
    %14 = vsyncpa %s13, 0
    loop: start=0, step=1, limit=4
    $region2: #{tpu_custom_call.1} parent=1 // loop_pre_header
      _
    $region3: #{tpu_custom_call.1} parent=1 // loop_header
      %s16 = sphi 0, %s20
      %p17 = scmp.ge.s32.totalorder %s16, 4
      %s23 = sphi 0, %s42
      %s24 = sphi 0, %s38
      %s25 = sphi 0, %s34
      %s26 = sphi 0, %s23
      %s27 = sphi 0, %s24
      %s28 = sphi 0, %s25
      %s29 = sphi 0, %s26
      %s30 = sphi 0, %s27
      %s31 = sphi 0, %s28
      %s47 = sphi 0, %s49
      %s50 = sphi 0, %s47
      %s51 = sphi 0, %s50
      %s67 = sphi 0, %s51
      %s75 = sphi 0, %s77
      %s78 = sphi 0, %s75
      %s79 = sphi 0, %s78
      %s95 = sphi 0, %s79
      %s101 = sphi 0, %s103
      %s104 = sphi 0, %s101
      %s105 = sphi 0, %s104
      %s121 = sphi 0, %s105
      %s129 = sphi 0, %s131
      %s132 = sphi 0, %s129
      %s133 = sphi 0, %s132
      %s149 = sphi 0, %s133
    $region4: #{tpu_custom_call.1} parent=1 // loop_header_branch
      %19 = sbr.rel (%p17) target = $region8
    $region5: #{tpu_custom_call.1} parent=1 // loop_body
      %s21 = ssub.s32 %s16, 1
      %s22 = ssub.s32 %s16, 2
      %s32 = sadd.s32 1, %s25
      %p33 = scmp.ge.s32.totalorder %s32, 1
      %s34 = scalar_select %p33, 0, %s32
      %s35 = sadd.s32 1, %s24
      %s36 = scalar_select %p33, %s35, %s24
      %p37 = scmp.ge.s32.totalorder %s36, 2
      %s38 = scalar_select %p37, 0, %s36
      %s39 = sadd.s32 1, %s23
      %s40 = scalar_select %p37, %s39, %s23
      %p41 = scmp.ge.s32.totalorder %s40, 1
      %s42 = scalar_select %p41, 0, %s40
      %s43 = ssub.s32 %s23, %s42
      %s44 = ssub.s32 %s25, %s34
      %s45 = sor.u32 %s43, %s44
      %p46 = scmp.eq.s32.totalorder %s45, 0
      %s48 = sadd.s32 %s47, 1
      %s49 = scalar_select %p46, %s47, %s48
      %p52 = pneg %p46
      %p53 = scmp.eq.s32.totalorder %s16, 1
      %p54 = por %p52, %p53
      %p55 = scmp.ne.s32.totalorder %s47, %s50
      %p56 = scmp.eq.s32.totalorder %s16, 0
      %p57 = por %p55, %p56
      %p58 = scmp.ne.s32.totalorder %s47, %s50
      %p59 = scmp.eq.s32.totalorder %s21, 1
      %p60 = por %p58, %p59
      %p61 = scmp.ne.s32.totalorder %s50, %s51
      %p62 = scmp.eq.s32.totalorder %s21, 0
      %p63 = por %p61, %p62
      %p64 = scmp.ne.s32.totalorder %s50, %s51
      %p65 = scmp.eq.s32.totalorder %s22, 1
      %p66 = por %p64, %p65
      %p68 = scmp.ne.s32.totalorder %s51, %s67
      %p69 = scmp.eq.s32.totalorder %s22, 0
      %p70 = por %p68, %p69
      %s71 = ssub.s32 %s25, %s34
      %s72 = ssub.s32 %s24, %s38
      %s73 = sor.u32 %s71, %s72
      %p74 = scmp.eq.s32.totalorder %s73, 0
      %s76 = sadd.s32 %s75, 1
      %s77 = scalar_select %p74, %s75, %s76
      %p80 = pneg %p74
      %p81 = scmp.eq.s32.totalorder %s16, 1
      %p82 = por %p80, %p81
      %p83 = scmp.ne.s32.totalorder %s75, %s78
      %p84 = scmp.eq.s32.totalorder %s16, 0
      %p85 = por %p83, %p84
      %p86 = scmp.ne.s32.totalorder %s75, %s78
      %p87 = scmp.eq.s32.totalorder %s21, 1
      %p88 = por %p86, %p87
      %p89 = scmp.ne.s32.totalorder %s78, %s79
      %p90 = scmp.eq.s32.totalorder %s21, 0
      %p91 = por %p89, %p90
      %p92 = scmp.ne.s32.totalorder %s78, %s79
      %p93 = scmp.eq.s32.totalorder %s22, 1
      %p94 = por %p92, %p93
      %p96 = scmp.ne.s32.totalorder %s79, %s95
      %p97 = scmp.eq.s32.totalorder %s22, 0
      %p98 = por %p96, %p97
      %s99 = ssub.s32 %s24, %s38
      %p100 = scmp.eq.s32.totalorder %s99, 0
      %s102 = sadd.s32 %s101, 1
      %s103 = scalar_select %p100, %s101, %s102
      %p106 = pneg %p100
      %p107 = scmp.eq.s32.totalorder %s16, 1
      %p108 = por %p106, %p107
      %p109 = scmp.ne.s32.totalorder %s101, %s104
      %p110 = scmp.eq.s32.totalorder %s16, 0
      %p111 = por %p109, %p110
      %p112 = scmp.ne.s32.totalorder %s101, %s104
      %p113 = scmp.eq.s32.totalorder %s21, 1
      %p114 = por %p112, %p113
      %p115 = scmp.ne.s32.totalorder %s104, %s105
      %p116 = scmp.eq.s32.totalorder %s21, 0
      %p117 = por %p115, %p116
      %p118 = scmp.ne.s32.totalorder %s104, %s105
      %p119 = scmp.eq.s32.totalorder %s22, 1
      %p120 = por %p118, %p119
      %p122 = scmp.ne.s32.totalorder %s105, %s121
      %p123 = scmp.eq.s32.totalorder %s22, 0
      %p124 = por %p122, %p123
      %s125 = ssub.s32 %s23, %s42
      %s126 = ssub.s32 %s24, %s38
      %s127 = sor.u32 %s125, %s126
      %p128 = scmp.eq.s32.totalorder %s127, 0
      %s130 = sadd.s32 %s129, 1
      %s131 = scalar_select %p128, %s129, %s130
      %p134 = pneg %p128
      %p135 = scmp.eq.s32.totalorder %s16, 1
      %p136 = por %p134, %p135
      %p137 = scmp.ne.s32.totalorder %s129, %s132
      %p138 = scmp.eq.s32.totalorder %s16, 0
      %p139 = por %p137, %p138
      %p140 = scmp.ne.s32.totalorder %s129, %s132
      %p141 = scmp.eq.s32.totalorder %s21, 1
      %p142 = por %p140, %p141
      %p143 = scmp.ne.s32.totalorder %s132, %s133
      %p144 = scmp.eq.s32.totalorder %s21, 0
      %p145 = por %p143, %p144
      %p146 = scmp.ne.s32.totalorder %s132, %s133
      %p147 = scmp.eq.s32.totalorder %s22, 1
      %p148 = por %p146, %p147
      %p150 = scmp.ne.s32.totalorder %s133, %s149
      %p151 = scmp.eq.s32.totalorder %s22, 0
      %p152 = por %p150, %p151
      %p153 = scmp.le.s32.totalorder 1, %s16
      %p154 = scmp.lt.s32.totalorder %s16, 3
      %p155 = pnand %p153, %p154
      %p156 = pneg %p155
      // Predicated region
      $region9: #{tpu_custom_call.1} parent=5 // pred_check
        _
      $region10: #{tpu_custom_call.1} parent=5 // pred_check_branch
        %158 = sbr.rel (%p155) target = $region12
      $region11: #{tpu_custom_call.1} parent=5 // pred_region
        %s159 = ssub.s32 %s16, 1
        // Predicated region
        $region13: #{tpu_custom_call.1} parent=11 // pred_check
          %p160 = pneg %p63
        $region14: #{tpu_custom_call.1} parent=11 // pred_check_branch
          %162 = sbr.rel (%p160) target = $region16
        $region15: #{tpu_custom_call.1} parent=11 // pred_region
          %s163 = smul.u32 4, %s26
          %s165 = ssub.s32 512, 512
          %166 = vsyncadd [#allocation4], %s165
          %s167 = sadd.s32 %s28, %s163
          %s168 = smul.addr %s167, 128
          %s169 = scalar_lea.hbm %s0, %s168
          %s170 = sshll.u32 [#allocation3], 4
          %s171 = int_to_ptr.vmem [resolvable:$true] %s170
          %176 = dma.hbm_to_vmem [thread:$0]  %s169, 512, %s171, [#allocation4], 128, 128, 8
        $region16: #{tpu_custom_call.1} parent=11 // pred_fallthru
          _
      $region12: #{tpu_custom_call.1} parent=5 // pred_fallthru
        _
      %p177 = scmp.lt.s32.totalorder %s16, 2
      // Predicated region
      $region17: #{tpu_custom_call.1} parent=5 // pred_check
        %p178 = pneg %p177
      $region18: #{tpu_custom_call.1} parent=5 // pred_check_branch
        %180 = sbr.rel (%p178) target = $region20
      $region19: #{tpu_custom_call.1} parent=5 // pred_region
        // Predicated region
        $region21: #{tpu_custom_call.1} parent=19 // pred_check
          %p181 = pneg %p85
        $region22: #{tpu_custom_call.1} parent=19 // pred_check_branch
          %183 = sbr.rel (%p181) target = $region24
        $region23: #{tpu_custom_call.1} parent=19 // pred_region
          %s184 = sand.u32 %s16, 1
          %s185 = scalar_lea.sflag [#allocation7], %s184
          %s186 = sand.u32 %s75, 1
          %s187 = smul.addr %s186, 192
          %s188 = scalar_lea.vmem [#allocation6], %s187
          %s189 = smul.u32 4, %s25
          %s190 = smul.u32 6, %s24
          %s192 = ssub.s32 3072, 3072
          %193 = vsyncadd %s185, %s192
          %s194 = smul.addr %s189, 12
          %s195 = sadd.s32 %s190, %s194
          %s196 = smul.addr %s195, 128
          %s197 = scalar_lea.hbm %s1, %s196
          %s198 = sshll.u32 %s188, 4
          %s199 = int_to_ptr.vmem [resolvable:$true] %s198
          %204 = dma.hbm_to_vmem [thread:$0]  %s197, 3072, %s199, %s185, 1536, 768, 48
        $region24: #{tpu_custom_call.1} parent=19 // pred_fallthru
          _
        // Predicated region
        $region25: #{tpu_custom_call.1} parent=19 // pred_check
          %p205 = pneg %p111
        $region26: #{tpu_custom_call.1} parent=19 // pred_check_branch
          %207 = sbr.rel (%p205) target = $region28
        $region27: #{tpu_custom_call.1} parent=19 // pred_region
          %s208 = sand.u32 %s16, 1
          %s209 = scalar_lea.sflag [#allocation7], %s208
          %s210 = sand.u32 %s101, 1
          %s211 = smul.addr %s210, 6
          %s212 = scalar_lea.vmem [#allocation8], %s211
          %s213 = smul.u32 6, %s24
          %s215 = ssub.s32 96, 96
          %216 = vsyncadd %s209, %s215
          %s217 = smul.addr %s213, 16
          %s218 = scalar_lea.hbm %s2, %s217
          %s220 = sshll.u32 %s212, 4
          %s221 = int_to_ptr.vmem [resolvable:$true] %s220
          %223 = dma.hbm_to_vmem [thread:$0]  %s218, 96, %s221, %s209
        $region28: #{tpu_custom_call.1} parent=19 // pred_fallthru
          _
      $region20: #{tpu_custom_call.1} parent=5 // pred_fallthru
        _
      %p224 = scmp.le.s32.totalorder 1, %s16
      %p225 = scmp.lt.s32.totalorder %s16, 3
      %p226 = pnand %p224, %p225
      %p227 = pneg %p226
      // Predicated region
      $region29: #{tpu_custom_call.1} parent=5 // pred_check
        _
      $region30: #{tpu_custom_call.1} parent=5 // pred_check_branch
        %229 = sbr.rel (%p226) target = $region32
      $region31: #{tpu_custom_call.1} parent=5 // pred_region
        %s230 = ssub.s32 %s16, 1
        // Predicated region
        $region33: #{tpu_custom_call.1} parent=31 // pred_check
          %p231 = pneg %p63
        $region34: #{tpu_custom_call.1} parent=31 // pred_check_branch
          %233 = sbr.rel (%p231) target = $region36
        $region35: #{tpu_custom_call.1} parent=31 // pred_region
          %234 = dma.done [#allocation4], 512
        $region36: #{tpu_custom_call.1} parent=31 // pred_fallthru
          _
        %s235 = sand.u32 %s21, 1
        %s236 = scalar_lea.sflag [#allocation7], %s235
        %s237 = sand.u32 %s78, 1
        %s238 = smul.addr %s237, 192
        %s239 = scalar_lea.vmem [#allocation6], %s238
        // Predicated region
        $region37: #{tpu_custom_call.1} parent=31 // pred_check
          %p240 = pneg %p91
        $region38: #{tpu_custom_call.1} parent=31 // pred_check_branch
          %242 = sbr.rel (%p240) target = $region40
        $region39: #{tpu_custom_call.1} parent=31 // pred_region
          %243 = dma.done %s236, 3072
        $region40: #{tpu_custom_call.1} parent=31 // pred_fallthru
          _
        %s244 = sand.u32 %s21, 1
        %s245 = scalar_lea.sflag [#allocation7], %s244
        %s246 = sand.u32 %s104, 1
        %s247 = smul.addr %s246, 6
        %s248 = scalar_lea.vmem [#allocation8], %s247
        // Predicated region
        $region41: #{tpu_custom_call.1} parent=31 // pred_check
          %p249 = pneg %p117
        $region42: #{tpu_custom_call.1} parent=31 // pred_check_branch
          %251 = sbr.rel (%p249) target = $region44
        $region43: #{tpu_custom_call.1} parent=31 // pred_region
          %252 = dma.done %s245, 96
        $region44: #{tpu_custom_call.1} parent=31 // pred_fallthru
          _
        %p253 = pneg %p63
        %p254 = pneg %p60
        %s255 = sand.u32 %s21, 1
        %s256 = scalar_lea.sflag [#allocation7], %s255
        %s257 = sand.u32 %s78, 1
        %s258 = smul.addr %s257, 192
        %s259 = scalar_lea.vmem [#allocation6], %s258
        %p260 = pneg %p91
        %p261 = pneg %p88
        %s262 = sand.u32 %s21, 1
        %s263 = scalar_lea.sflag [#allocation7], %s262
        %s264 = sand.u32 %s104, 1
        %s265 = smul.addr %s264, 6
        %s266 = scalar_lea.vmem [#allocation8], %s265
        %p267 = pneg %p117
        %p268 = pneg %p114
        %p269 = pneg %p145
        %p270 = pneg %p142
        %s271 = sand.u32 %s132, 1
        %s272 = scalar_lea.sflag [#allocation5], %s271
        %s273 = sand.u32 %s132, 1
        %s274 = smul.addr %s273, 192
        %s275 = scalar_lea.vmem [#allocation9], %s274
        %s276 = smul.u32 4, %s26
        %s277 = smul.u32 4, %s28
        %s278 = smul.u32 6, %s27
        %s279 = smul.u32 6, %s27
        %s280 = smul.u32 4, %s26
        %s281 = smul.u32 6, %s27
        %p282 = scmp.eq.s32.totalorder %s28, 0
        // Predicated region
        $region45: #{tpu_custom_call.1} parent=31 // pred_check
          %p283 = pneg %p282
        $region46: #{tpu_custom_call.1} parent=31 // pred_check_branch
          %285 = sbr.rel (%p283) target = $region48
        $region47: #{tpu_custom_call.1} parent=31 // pred_region
          %286 = vst [vmem:[#allocation2] sm:$0xff] 0.0
          %287 = vst [vmem:[#allocation2 + $0x8] sm:$0xff] 0.0
          %288 = vst [vmem:[#allocation2 + $0x10] sm:$0xff] 0.0
          %289 = vst [vmem:[#allocation2 + $0x18] sm:$0xff] 0.0
          %290 = vst [vmem:[#allocation2 + $0x20] sm:$0xff] 0.0
          %291 = vst [vmem:[#allocation2 + $0x28] sm:$0xff] 0.0
          %292 = vst [vmem:[#allocation2 + $0x30] sm:$0xff] 0.0
          %293 = vst [vmem:[#allocation2 + $0x38] sm:$0xff] 0.0
          %294 = vst [vmem:[#allocation2 + $0x40] sm:$0xff] 0.0
          %295 = vst [vmem:[#allocation2 + $0x48] sm:$0xff] 0.0
          %296 = vst [vmem:[#allocation2 + $0x50] sm:$0xff] 0.0
          %297 = vst [vmem:[#allocation2 + $0x58] sm:$0xff] 0.0
          %298 = vst [vmem:[#allocation2 + $0x60] sm:$0xff] 0.0
          %299 = vst [vmem:[#allocation2 + $0x68] sm:$0xff] 0.0
          %300 = vst [vmem:[#allocation2 + $0x70] sm:$0xff] 0.0
          %301 = vst [vmem:[#allocation2 + $0x78] sm:$0xff] 0.0
          %302 = vst [vmem:[#allocation2 + $0x80] sm:$0xff] 0.0
          %303 = vst [vmem:[#allocation2 + $0x88] sm:$0xff] 0.0
          %304 = vst [vmem:[#allocation2 + $0x90] sm:$0xff] 0.0
          %305 = vst [vmem:[#allocation2 + $0x98] sm:$0xff] 0.0
          %306 = vst [vmem:[#allocation2 + $0xa0] sm:$0xff] 0.0
          %307 = vst [vmem:[#allocation2 + $0xa8] sm:$0xff] 0.0
          %308 = vst [vmem:[#allocation2 + $0xb0] sm:$0xff] 0.0
          %309 = vst [vmem:[#allocation2 + $0xb8] sm:$0xff] 0.0
        $region48: #{tpu_custom_call.1} parent=31 // pred_fallthru
          _
        %v310 = vld [vmem:[#allocation2] sm:$0xff]
        %v311 = vld [vmem:[#allocation2 + $0x8] sm:$0xff]
        %v312 = vld [vmem:[#allocation2 + $0x10] sm:$0xff]
        %v313 = vld [vmem:[#allocation2 + $0x18] sm:$0xff]
        %v314 = vld [vmem:[#allocation2 + $0x20] sm:$0xff]
        %v315 = vld [vmem:[#allocation2 + $0x28] sm:$0xff]
        %v316 = vld [vmem:[#allocation2 + $0x30] sm:$0xff]
        %v317 = vld [vmem:[#allocation2 + $0x38] sm:$0xff]
        %v318 = vld [vmem:[#allocation2 + $0x40] sm:$0xff]
        %v319 = vld [vmem:[#allocation2 + $0x48] sm:$0xff]
        %v320 = vld [vmem:[#allocation2 + $0x50] sm:$0xff]
        %v321 = vld [vmem:[#allocation2 + $0x58] sm:$0xff]
        %v322 = vld [vmem:[#allocation2 + $0x60] sm:$0xff]
        %v323 = vld [vmem:[#allocation2 + $0x68] sm:$0xff]
        %v324 = vld [vmem:[#allocation2 + $0x70] sm:$0xff]
        %v325 = vld [vmem:[#allocation2 + $0x78] sm:$0xff]
        %v326 = vld [vmem:[#allocation2 + $0x80] sm:$0xff]
        %v327 = vld [vmem:[#allocation2 + $0x88] sm:$0xff]
        %v328 = vld [vmem:[#allocation2 + $0x90] sm:$0xff]
        %v329 = vld [vmem:[#allocation2 + $0x98] sm:$0xff]
        %v330 = vld [vmem:[#allocation2 + $0xa0] sm:$0xff]
        %v331 = vld [vmem:[#allocation2 + $0xa8] sm:$0xff]
        %v332 = vld [vmem:[#allocation2 + $0xb0] sm:$0xff]
        %v333 = vld [vmem:[#allocation2 + $0xb8] sm:$0xff]
        %v334 = vld [vmem:[#allocation3] sm:$0xff]
        %v335 = vld [vmem:[#allocation3 + $0x8] sm:$0xff]
        %v336 = vld [vmem:[#allocation3 + $0x10] sm:$0xff]
        %v337 = vld [vmem:[#allocation3 + $0x18] sm:$0xff]
        %v338 = vld [vmem:[%s239] sm:$0xff]
        %v339 = vld [vmem:[%s239 + $0x8] sm:$0xff]
        %v340 = vld [vmem:[%s239 + $0x10] sm:$0xff]
        %v341 = vld [vmem:[%s239 + $0x18] sm:$0xff]
        %v342 = vld [vmem:[%s239 + $0x20] sm:$0xff]
        %v343 = vld [vmem:[%s239 + $0x28] sm:$0xff]
        %v344 = vld [vmem:[%s239 + $0x30] sm:$0xff]
        %v345 = vld [vmem:[%s239 + $0x38] sm:$0xff]
        %v346 = vld [vmem:[%s239 + $0x40] sm:$0xff]
        %v347 = vld [vmem:[%s239 + $0x48] sm:$0xff]
        %v348 = vld [vmem:[%s239 + $0x50] sm:$0xff]
        %v349 = vld [vmem:[%s239 + $0x58] sm:$0xff]
        %v350 = vld [vmem:[%s239 + $0x60] sm:$0xff]
        %v351 = vld [vmem:[%s239 + $0x68] sm:$0xff]
        %v352 = vld [vmem:[%s239 + $0x70] sm:$0xff]
        %v353 = vld [vmem:[%s239 + $0x78] sm:$0xff]
        %v354 = vld [vmem:[%s239 + $0x80] sm:$0xff]
        %v355 = vld [vmem:[%s239 + $0x88] sm:$0xff]
        %v356 = vld [vmem:[%s239 + $0x90] sm:$0xff]
        %v357 = vld [vmem:[%s239 + $0x98] sm:$0xff]
        %v358 = vld [vmem:[%s239 + $0xa0] sm:$0xff]
        %v359 = vld [vmem:[%s239 + $0xa8] sm:$0xff]
        %v360 = vld [vmem:[%s239 + $0xb0] sm:$0xff]
        %v361 = vld [vmem:[%s239 + $0xb8] sm:$0xff]
        %vm362 = vcmask 261120
        %v364 = vsel %vm362, %v334, 0
        %v367 = vsel %vm362, %v335, 0
        %v370 = vsel %vm362, %v336, 0
        %v373 = vsel %vm362, %v337, 0
        %375 = vmatprep.subr.mxu0 %v339
        %376 = vmatpush1.msra.mxu0 %v338
        %377 = vmatprep.subr.mxu0 %v345
        %378 = vmatpush1.msra.mxu0 %v344
        %379 = vmatprep.subr.mxu0 %v351
        %380 = vmatpush1.msra.mxu0 %v350
        %381 = vmatprep.subr.mxu0 %v357
        %382 = vmatpush1.msra.mxu0 %v356
        %383 = vmatprep.subr.mxu0 0.0
        %384 = vmatpush1.msra.mxu0 0.0
        %385 = vmatprep.subr.mxu0 0.0
        %386 = vmatpush1.msra.mxu0 0.0
        %387 = vmatprep.subr.mxu0 0.0
        %388 = vmatpush1.msra.mxu0 0.0
        %389 = vmatprep.subr.mxu0 0.0
        %390 = vmatpush1.msra.mxu0 0.0
        %391 = vmatprep.subr.mxu0 0.0
        %392 = vmatpush1.msra.mxu0 0.0
        %393 = vmatprep.subr.mxu0 0.0
        %394 = vmatpush1.msra.mxu0 0.0
        %395 = vmatprep.subr.mxu0 0.0
        %396 = vmatpush1.msra.mxu0 0.0
        %397 = vmatprep.subr.mxu0 0.0
        %398 = vmatpush1.msra.mxu0 0.0
        %399 = vmatprep.subr.mxu0 0.0
        %400 = vmatpush1.msra.mxu0 0.0
        %401 = vmatprep.subr.mxu0 0.0
        %402 = vmatpush1.msra.mxu0 0.0
        %403 = vmatprep.subr.mxu0 0.0
        %404 = vmatpush1.msra.mxu0 0.0
        %405 = vmatprep.subr.mxu0 0.0
        %406 = vmatpush1.msra.mxu0 0.0
        %407 = vmatprep.subr.mxu0 0.0
        %408 = vmatpush1.msra.mxu0 0.0
        %409 = vmatprep.subr.mxu0 0.0
        %410 = vmatpush1.msra.mxu0 0.0
        %411 = vmatprep.subr.mxu0 0.0
        %412 = vmatpush1.msra.mxu0 0.0
        %413 = vmatprep.subr.mxu0 0.0
        %414 = vmatpush1.msra.mxu0 0.0
        %415 = vmatprep.subr.mxu0 0.0
        %416 = vmatpush1.msra.mxu0 0.0
        %417 = vmatprep.subr.mxu0 0.0
        %418 = vmatpush1.msra.mxu0 0.0
        %419 = vmatprep.subr.mxu0 0.0
        %420 = vmatpush1.msra.mxu0 0.0
        %421 = vmatprep.subr.mxu0 0.0
        %422 = vmatpush1.msra.mxu0 0.0
        %423 = vmatprep.subr.mxu0 0.0
        %424 = vmatpush1.msra.mxu0 0.0
        %425 = vmatprep.subr.mxu0 0.0
        %426 = vmatpush1.msra.mxu0 0.0
        %427 = vmatprep.subr.mxu0 0.0
        %428 = vmatpush1.msra.mxu0 0.0
        %429 = vmatprep.subr.mxu0 0.0
        %430 = vmatpush1.msra.mxu0 0.0
        %431 = vmatprep.subr.mxu0 0.0
        %432 = vmatpush1.msra.mxu0 0.0
        %433 = vmatprep.subr.mxu0 0.0
        %434 = vmatpush1.msra.mxu0 0.0
        %435 = vmatprep.subr.mxu0 0.0
        %436 = vmatpush1.msra.mxu0 0.0
        %437 = vmatprep.subr.mxu0 0.0
        %438 = vmatpush1.msra.mxu0 0.0
        %439 = vmatprep.mubr.f32.mxu0 0.0
        %440 = vmatmul.mubr.f32.gmra.mrb[0].mxu0 %v364
        %v441 = vpop.f32.mrb[0].mxu0
        %v442 = vadd.f32 0.0, %v441
        %v443 = vpop.f32.mrb[0].mxu0
        %v444 = vadd.f32 0.0, %v443
        %445 = vmatprep.mubr.f32.mxu0 0.0
        %446 = vmatmul.mubr.f32.gmra.mrb[0].mxu0 %v367
        %v447 = vpop.f32.mrb[0].mxu0
        %v448 = vadd.f32 0.0, %v447
        %v449 = vpop.f32.mrb[0].mxu0
        %v450 = vadd.f32 0.0, %v449
        %451 = vmatprep.mubr.f32.mxu0 0.0
        %452 = vmatmul.mubr.f32.gmra.mrb[0].mxu0 %v370
        %v453 = vpop.f32.mrb[0].mxu0
        %v454 = vadd.f32 0.0, %v453
        %v455 = vpop.f32.mrb[0].mxu0
        %v456 = vadd.f32 0.0, %v455
        %457 = vmatprep.mubr.f32.mxu0 0.0
        %458 = vmatmul.mubr.f32.gmra.mrb[0].mxu0 %v373
        %v459 = vpop.f32.mrb[0].mxu0
        %v460 = vadd.f32 0.0, %v459
        %v461 = vpop.f32.mrb[0].mxu0
        %v462 = vadd.f32 0.0, %v461
        %463 = vdwg.mxu0
        %464 = vmatprep.subr.mxu0 %v341
        %465 = vmatpush1.msra.mxu0 %v340
        %466 = vmatprep.subr.mxu0 %v347
        %467 = vmatpush1.msra.mxu0 %v346
        %468 = vmatprep.subr.mxu0 %v353
        %469 = vmatpush1.msra.mxu0 %v352
        %470 = vmatprep.subr.mxu0 %v359
        %471 = vmatpush1.msra.mxu0 %v358
        %472 = vmatprep.subr.mxu0 0.0
        %473 = vmatpush1.msra.mxu0 0.0
        %474 = vmatprep.subr.mxu0 0.0
        %475 = vmatpush1.msra.mxu0 0.0
        %476 = vmatprep.subr.mxu0 0.0
        %477 = vmatpush1.msra.mxu0 0.0
        %478 = vmatprep.subr.mxu0 0.0
        %479 = vmatpush1.msra.mxu0 0.0
        %480 = vmatprep.subr.mxu0 0.0
        %481 = vmatpush1.msra.mxu0 0.0
        %482 = vmatprep.subr.mxu0 0.0
        %483 = vmatpush1.msra.mxu0 0.0
        %484 = vmatprep.subr.mxu0 0.0
        %485 = vmatpush1.msra.mxu0 0.0
        %486 = vmatprep.subr.mxu0 0.0
        %487 = vmatpush1.msra.mxu0 0.0
        %488 = vmatprep.subr.mxu0 0.0
        %489 = vmatpush1.msra.mxu0 0.0
        %490 = vmatprep.subr.mxu0 0.0
        %491 = vmatpush1.msra.mxu0 0.0
        %492 = vmatprep.subr.mxu0 0.0
        %493 = vmatpush1.msra.mxu0 0.0
        %494 = vmatprep.subr.mxu0 0.0
        %495 = vmatpush1.msra.mxu0 0.0
        %496 = vmatprep.subr.mxu0 0.0
        %497 = vmatpush1.msra.mxu0 0.0
        %498 = vmatprep.subr.mxu0 0.0
        %499 = vmatpush1.msra.mxu0 0.0
        %500 = vmatprep.subr.mxu0 0.0
        %501 = vmatpush1.msra.mxu0 0.0
        %502 = vmatprep.subr.mxu0 0.0
        %503 = vmatpush1.msra.mxu0 0.0
        %504 = vmatprep.subr.mxu0 0.0
        %505 = vmatpush1.msra.mxu0 0.0
        %506 = vmatprep.subr.mxu0 0.0
        %507 = vmatpush1.msra.mxu0 0.0
        %508 = vmatprep.subr.mxu0 0.0
        %509 = vmatpush1.msra.mxu0 0.0
        %510 = vmatprep.subr.mxu0 0.0
        %511 = vmatpush1.msra.mxu0 0.0
        %512 = vmatprep.subr.mxu0 0.0
        %513 = vmatpush1.msra.mxu0 0.0
        %514 = vmatprep.subr.mxu0 0.0
        %515 = vmatpush1.msra.mxu0 0.0
        %516 = vmatprep.subr.mxu0 0.0
        %517 = vmatpush1.msra.mxu0 0.0
        %518 = vmatprep.subr.mxu0 0.0
        %519 = vmatpush1.msra.mxu0 0.0
        %520 = vmatprep.subr.mxu0 0.0
        %521 = vmatpush1.msra.mxu0 0.0
        %522 = vmatprep.subr.mxu0 0.0
        %523 = vmatpush1.msra.mxu0 0.0
        %524 = vmatprep.subr.mxu0 0.0
        %525 = vmatpush1.msra.mxu0 0.0
        %526 = vmatprep.subr.mxu0 0.0
        %527 = vmatpush1.msra.mxu0 0.0
        %528 = vmatprep.mubr.f32.mxu0 0.0
        %529 = vmatmul.mubr.f32.gmra.mrb[0].mxu0 %v364
        %v530 = vpop.f32.mrb[0].mxu0
        %v531 = vadd.f32 0.0, %v530
        %v532 = vpop.f32.mrb[0].mxu0
        %v533 = vadd.f32 0.0, %v532
        %534 = vmatprep.mubr.f32.mxu0 0.0
        %535 = vmatmul.mubr.f32.gmra.mrb[0].mxu0 %v367
        %v536 = vpop.f32.mrb[0].mxu0
        %v537 = vadd.f32 0.0, %v536
        %v538 = vpop.f32.mrb[0].mxu0
        %v539 = vadd.f32 0.0, %v538
        %540 = vmatprep.mubr.f32.mxu0 0.0
        %541 = vmatmul.mubr.f32.gmra.mrb[0].mxu0 %v370
        %v542 = vpop.f32.mrb[0].mxu0
        %v543 = vadd.f32 0.0, %v542
        %v544 = vpop.f32.mrb[0].mxu0
        %v545 = vadd.f32 0.0, %v544
        %546 = vmatprep.mubr.f32.mxu0 0.0
        %547 = vmatmul.mubr.f32.gmra.mrb[0].mxu0 %v373
        %v548 = vpop.f32.mrb[0].mxu0
        %v549 = vadd.f32 0.0, %v548
        %v550 = vpop.f32.mrb[0].mxu0
        %v551 = vadd.f32 0.0, %v550
        %552 = vdwg.mxu0
        %553 = vmatprep.subr.mxu0 %v343
        %554 = vmatpush1.msra.mxu0 %v342
        %555 = vmatprep.subr.mxu0 %v349
        %556 = vmatpush1.msra.mxu0 %v348
        %557 = vmatprep.subr.mxu0 %v355
        %558 = vmatpush1.msra.mxu0 %v354
        %559 = vmatprep.subr.mxu0 %v361
        %560 = vmatpush1.msra.mxu0 %v360
        %561 = vmatprep.subr.mxu0 0.0
        %562 = vmatpush1.msra.mxu0 0.0
        %563 = vmatprep.subr.mxu0 0.0
        %564 = vmatpush1.msra.mxu0 0.0
        %565 = vmatprep.subr.mxu0 0.0
        %566 = vmatpush1.msra.mxu0 0.0
        %567 = vmatprep.subr.mxu0 0.0
        %568 = vmatpush1.msra.mxu0 0.0
        %569 = vmatprep.subr.mxu0 0.0
        %570 = vmatpush1.msra.mxu0 0.0
        %571 = vmatprep.subr.mxu0 0.0
        %572 = vmatpush1.msra.mxu0 0.0
        %573 = vmatprep.subr.mxu0 0.0
        %574 = vmatpush1.msra.mxu0 0.0
        %575 = vmatprep.subr.mxu0 0.0
        %576 = vmatpush1.msra.mxu0 0.0
        %577 = vmatprep.subr.mxu0 0.0
        %578 = vmatpush1.msra.mxu0 0.0
        %579 = vmatprep.subr.mxu0 0.0
        %580 = vmatpush1.msra.mxu0 0.0
        %581 = vmatprep.subr.mxu0 0.0
        %582 = vmatpush1.msra.mxu0 0.0
        %583 = vmatprep.subr.mxu0 0.0
        %584 = vmatpush1.msra.mxu0 0.0
        %585 = vmatprep.subr.mxu0 0.0
        %586 = vmatpush1.msra.mxu0 0.0
        %587 = vmatprep.subr.mxu0 0.0
        %588 = vmatpush1.msra.mxu0 0.0
        %589 = vmatprep.subr.mxu0 0.0
        %590 = vmatpush1.msra.mxu0 0.0
        %591 = vmatprep.subr.mxu0 0.0
        %592 = vmatpush1.msra.mxu0 0.0
        %593 = vmatprep.subr.mxu0 0.0
        %594 = vmatpush1.msra.mxu0 0.0
        %595 = vmatprep.subr.mxu0 0.0
        %596 = vmatpush1.msra.mxu0 0.0
        %597 = vmatprep.subr.mxu0 0.0
        %598 = vmatpush1.msra.mxu0 0.0
        %599 = vmatprep.subr.mxu0 0.0
        %600 = vmatpush1.msra.mxu0 0.0
        %601 = vmatprep.subr.mxu0 0.0
        %602 = vmatpush1.msra.mxu0 0.0
        %603 = vmatprep.subr.mxu0 0.0
        %604 = vmatpush1.msra.mxu0 0.0
        %605 = vmatprep.subr.mxu0 0.0
        %606 = vmatpush1.msra.mxu0 0.0
        %607 = vmatprep.subr.mxu0 0.0
        %608 = vmatpush1.msra.mxu0 0.0
        %609 = vmatprep.subr.mxu0 0.0
        %610 = vmatpush1.msra.mxu0 0.0
        %611 = vmatprep.subr.mxu0 0.0
        %612 = vmatpush1.msra.mxu0 0.0
        %613 = vmatprep.subr.mxu0 0.0
        %614 = vmatpush1.msra.mxu0 0.0
        %615 = vmatprep.subr.mxu0 0.0
        %616 = vmatpush1.msra.mxu0 0.0
        %617 = vmatprep.mubr.f32.mxu0 0.0
        %618 = vmatmul.mubr.f32.gmra.mrb[0].mxu0 %v364
        %v619 = vpop.f32.mrb[0].mxu0
        %v620 = vadd.f32 0.0, %v619
        %v621 = vpop.f32.mrb[0].mxu0
        %v622 = vadd.f32 0.0, %v621
        %623 = vmatprep.mubr.f32.mxu0 0.0
        %624 = vmatmul.mubr.f32.gmra.mrb[0].mxu0 %v367
        %v625 = vpop.f32.mrb[0].mxu0
        %v626 = vadd.f32 0.0, %v625
        %v627 = vpop.f32.mrb[0].mxu0
        %v628 = vadd.f32 0.0, %v627
        %629 = vmatprep.mubr.f32.mxu0 0.0
        %630 = vmatmul.mubr.f32.gmra.mrb[0].mxu0 %v370
        %v631 = vpop.f32.mrb[0].mxu0
        %v632 = vadd.f32 0.0, %v631
        %v633 = vpop.f32.mrb[0].mxu0
        %v634 = vadd.f32 0.0, %v633
        %635 = vmatprep.mubr.f32.mxu0 0.0
        %636 = vmatmul.mubr.f32.gmra.mrb[0].mxu0 %v373
        %v637 = vpop.f32.mrb[0].mxu0
        %v638 = vadd.f32 0.0, %v637
        %v639 = vpop.f32.mrb[0].mxu0
        %v640 = vadd.f32 0.0, %v639
        %641 = vdwg.mxu0
        %v642 = vadd.f32 %v310, %v442
        %v643 = vadd.f32 %v311, %v444
        %v644 = vadd.f32 %v312, %v531
        %v645 = vadd.f32 %v313, %v533
        %v646 = vadd.f32 %v314, %v620
        %v647 = vadd.f32 %v315, %v622
        %v648 = vadd.f32 %v316, %v448
        %v649 = vadd.f32 %v317, %v450
        %v650 = vadd.f32 %v318, %v537
        %v651 = vadd.f32 %v319, %v539
        %v652 = vadd.f32 %v320, %v626
        %v653 = vadd.f32 %v321, %v628
        %v654 = vadd.f32 %v322, %v454
        %v655 = vadd.f32 %v323, %v456
        %v656 = vadd.f32 %v324, %v543
        %v657 = vadd.f32 %v325, %v545
        %v658 = vadd.f32 %v326, %v632
        %v659 = vadd.f32 %v327, %v634
        %v660 = vadd.f32 %v328, %v460
        %v661 = vadd.f32 %v329, %v462
        %v662 = vadd.f32 %v330, %v549
        %v663 = vadd.f32 %v331, %v551
        %v664 = vadd.f32 %v332, %v638
        %v665 = vadd.f32 %v333, %v640
        %666 = vst [vmem:[#allocation2] sm:$0xff] %v642
        %667 = vst [vmem:[#allocation2 + $0x8] sm:$0xff] %v643
        %668 = vst [vmem:[#allocation2 + $0x10] sm:$0xff] %v644
        %669 = vst [vmem:[#allocation2 + $0x18] sm:$0xff] %v645
        %670 = vst [vmem:[#allocation2 + $0x20] sm:$0xff] %v646
        %671 = vst [vmem:[#allocation2 + $0x28] sm:$0xff] %v647
        %672 = vst [vmem:[#allocation2 + $0x30] sm:$0xff] %v648
        %673 = vst [vmem:[#allocation2 + $0x38] sm:$0xff] %v649
        %674 = vst [vmem:[#allocation2 + $0x40] sm:$0xff] %v650
        %675 = vst [vmem:[#allocation2 + $0x48] sm:$0xff] %v651
        %676 = vst [vmem:[#allocation2 + $0x50] sm:$0xff] %v652
        %677 = vst [vmem:[#allocation2 + $0x58] sm:$0xff] %v653
        %678 = vst [vmem:[#allocation2 + $0x60] sm:$0xff] %v654
        %679 = vst [vmem:[#allocation2 + $0x68] sm:$0xff] %v655
        %680 = vst [vmem:[#allocation2 + $0x70] sm:$0xff] %v656
        %681 = vst [vmem:[#allocation2 + $0x78] sm:$0xff] %v657
        %682 = vst [vmem:[#allocation2 + $0x80] sm:$0xff] %v658
        %683 = vst [vmem:[#allocation2 + $0x88] sm:$0xff] %v659
        %684 = vst [vmem:[#allocation2 + $0x90] sm:$0xff] %v660
        %685 = vst [vmem:[#allocation2 + $0x98] sm:$0xff] %v661
        %686 = vst [vmem:[#allocation2 + $0xa0] sm:$0xff] %v662
        %687 = vst [vmem:[#allocation2 + $0xa8] sm:$0xff] %v663
        %688 = vst [vmem:[#allocation2 + $0xb0] sm:$0xff] %v664
        %689 = vst [vmem:[#allocation2 + $0xb8] sm:$0xff] %v665
        // Predicated region
        $region49: #{tpu_custom_call.1} parent=31 // pred_check
          %p690 = pneg %p282
        $region50: #{tpu_custom_call.1} parent=31 // pred_check_branch
          %692 = sbr.rel (%p690) target = $region52
        $region51: #{tpu_custom_call.1} parent=31 // pred_region
          %v693 = vld [vmem:[#allocation2] sm:$0xff]
          %v694 = vld [vmem:[#allocation2 + $0x8] sm:$0xff]
          %v695 = vld [vmem:[#allocation2 + $0x10] sm:$0xff]
          %v696 = vld [vmem:[#allocation2 + $0x18] sm:$0xff]
          %v697 = vld [vmem:[#allocation2 + $0x20] sm:$0xff]
          %v698 = vld [vmem:[#allocation2 + $0x28] sm:$0xff]
          %v699 = vld [vmem:[#allocation2 + $0x30] sm:$0xff]
          %v700 = vld [vmem:[#allocation2 + $0x38] sm:$0xff]
          %v701 = vld [vmem:[#allocation2 + $0x40] sm:$0xff]
          %v702 = vld [vmem:[#allocation2 + $0x48] sm:$0xff]
          %v703 = vld [vmem:[#allocation2 + $0x50] sm:$0xff]
          %v704 = vld [vmem:[#allocation2 + $0x58] sm:$0xff]
          %v705 = vld [vmem:[#allocation2 + $0x60] sm:$0xff]
          %v706 = vld [vmem:[#allocation2 + $0x68] sm:$0xff]
          %v707 = vld [vmem:[#allocation2 + $0x70] sm:$0xff]
          %v708 = vld [vmem:[#allocation2 + $0x78] sm:$0xff]
          %v709 = vld [vmem:[#allocation2 + $0x80] sm:$0xff]
          %v710 = vld [vmem:[#allocation2 + $0x88] sm:$0xff]
          %v711 = vld [vmem:[#allocation2 + $0x90] sm:$0xff]
          %v712 = vld [vmem:[#allocation2 + $0x98] sm:$0xff]
          %v713 = vld [vmem:[#allocation2 + $0xa0] sm:$0xff]
          %v714 = vld [vmem:[#allocation2 + $0xa8] sm:$0xff]
          %v715 = vld [vmem:[#allocation2 + $0xb0] sm:$0xff]
          %v716 = vld [vmem:[#allocation2 + $0xb8] sm:$0xff]
          %v717 = vld [vmem:[%s248] sm:$0x3f]
          %v719 = vlaneseq
          %v720 = vshrl.u32 %v719, 7
          %v721 = vsub.s32 0, %v720
          %v722 = vrot.slane %v717, %v721
          %v723 = vlaneseq
          %v724 = vshrl.u32 %v723, 7
          %v725 = vsub.s32 1, %v724
          %v726 = vrot.slane %v717, %v725
          %v727 = vlaneseq
          %v728 = vshrl.u32 %v727, 7
          %v729 = vsub.s32 2, %v728
          %v730 = vrot.slane %v717, %v729
          %v731 = vlaneseq
          %v732 = vshrl.u32 %v731, 7
          %v733 = vsub.s32 3, %v732
          %v734 = vrot.slane %v717, %v733
          %v735 = vlaneseq
          %v736 = vshrl.u32 %v735, 7
          %v737 = vsub.s32 4, %v736
          %v738 = vrot.slane %v717, %v737
          %v739 = vlaneseq
          %v740 = vshrl.u32 %v739, 7
          %v741 = vsub.s32 5, %v740
          %v742 = vrot.slane %v717, %v741
          %v749 = vadd.f32 %v693, %v722
          %v750 = vadd.f32 %v694, %v726
          %v751 = vadd.f32 %v695, %v730
          %v752 = vadd.f32 %v696, %v734
          %v753 = vadd.f32 %v697, %v738
          %v754 = vadd.f32 %v698, %v742
          %v755 = vadd.f32 %v699, %v722
          %v756 = vadd.f32 %v700, %v726
          %v757 = vadd.f32 %v701, %v730
          %v758 = vadd.f32 %v702, %v734
          %v759 = vadd.f32 %v703, %v738
          %v760 = vadd.f32 %v704, %v742
          %v761 = vadd.f32 %v705, %v722
          %v762 = vadd.f32 %v706, %v726
          %v763 = vadd.f32 %v707, %v730
          %v764 = vadd.f32 %v708, %v734
          %v765 = vadd.f32 %v709, %v738
          %v766 = vadd.f32 %v710, %v742
          %v767 = vadd.f32 %v711, %v722
          %v768 = vadd.f32 %v712, %v726
          %v769 = vadd.f32 %v713, %v730
          %v770 = vadd.f32 %v714, %v734
          %v771 = vadd.f32 %v715, %v738
          %v772 = vadd.f32 %v716, %v742
          %773 = vst [vmem:[%s275] sm:$0xff] %v749
          %774 = vst [vmem:[%s275 + $0x8] sm:$0xff] %v750
          %775 = vst [vmem:[%s275 + $0x10] sm:$0xff] %v751
          %776 = vst [vmem:[%s275 + $0x18] sm:$0xff] %v752
          %777 = vst [vmem:[%s275 + $0x20] sm:$0xff] %v753
          %778 = vst [vmem:[%s275 + $0x28] sm:$0xff] %v754
          %779 = vst [vmem:[%s275 + $0x30] sm:$0xff] %v755
          %780 = vst [vmem:[%s275 + $0x38] sm:$0xff] %v756
          %781 = vst [vmem:[%s275 + $0x40] sm:$0xff] %v757
          %782 = vst [vmem:[%s275 + $0x48] sm:$0xff] %v758
          %783 = vst [vmem:[%s275 + $0x50] sm:$0xff] %v759
          %784 = vst [vmem:[%s275 + $0x58] sm:$0xff] %v760
          %785 = vst [vmem:[%s275 + $0x60] sm:$0xff] %v761
          %786 = vst [vmem:[%s275 + $0x68] sm:$0xff] %v762
          %787 = vst [vmem:[%s275 + $0x70] sm:$0xff] %v763
          %788 = vst [vmem:[%s275 + $0x78] sm:$0xff] %v764
          %789 = vst [vmem:[%s275 + $0x80] sm:$0xff] %v765
          %790 = vst [vmem:[%s275 + $0x88] sm:$0xff] %v766
          %791 = vst [vmem:[%s275 + $0x90] sm:$0xff] %v767
          %792 = vst [vmem:[%s275 + $0x98] sm:$0xff] %v768
          %793 = vst [vmem:[%s275 + $0xa0] sm:$0xff] %v769
          %794 = vst [vmem:[%s275 + $0xa8] sm:$0xff] %v770
          %795 = vst [vmem:[%s275 + $0xb0] sm:$0xff] %v771
          %796 = vst [vmem:[%s275 + $0xb8] sm:$0xff] %v772
        $region52: #{tpu_custom_call.1} parent=31 // pred_fallthru
          _
        %s797 = sand.u32 %s132, 1
        %s798 = scalar_lea.sflag [#allocation5], %s797
        %s799 = sand.u32 %s132, 1
        %s800 = smul.addr %s799, 192
        %s801 = scalar_lea.vmem [#allocation9], %s800
        // Predicated region
        $region53: #{tpu_custom_call.1} parent=31 // pred_check
          %p802 = pneg %p142
        $region54: #{tpu_custom_call.1} parent=31 // pred_check_branch
          %804 = sbr.rel (%p802) target = $region56
        $region55: #{tpu_custom_call.1} parent=31 // pred_region
          %s805 = smul.u32 4, %s26
          %s806 = smul.u32 6, %s27
          %s808 = ssub.s32 3072, 3072
          %809 = vsyncadd %s798, %s808
          %s810 = smul.addr %s805, 12
          %s811 = sadd.s32 %s806, %s810
          %s812 = smul.addr %s811, 128
          %s813 = scalar_lea.hbm %s3, %s812
          %s814 = sshll.u32 %s801, 4
          %s815 = int_to_ptr.vmem [resolvable:$true] %s814
          %820 = dma.vmem_to_hbm [thread:$0]  %s815, 3072, %s813, %s798, 768, 1536, 48
        $region56: #{tpu_custom_call.1} parent=31 // pred_fallthru
          _
      $region32: #{tpu_custom_call.1} parent=5 // pred_fallthru
        _
      %p821 = scmp.le.s32.totalorder 2, %s16
      // Predicated region
      $region57: #{tpu_custom_call.1} parent=5 // pred_check
        %p822 = pneg %p821
      $region58: #{tpu_custom_call.1} parent=5 // pred_check_branch
        %824 = sbr.rel (%p822) target = $region60
      $region59: #{tpu_custom_call.1} parent=5 // pred_region
        %s825 = ssub.s32 %s16, 2
        // Predicated region
        $region61: #{tpu_custom_call.1} parent=59 // pred_check
          %p826 = pneg %p148
        $region62: #{tpu_custom_call.1} parent=59 // pred_check_branch
          %828 = sbr.rel (%p826) target = $region64
        $region63: #{tpu_custom_call.1} parent=59 // pred_region
          %s829 = sand.u32 %s133, 1
          %s830 = scalar_lea.sflag [#allocation5], %s829
          %s831 = sand.u32 %s133, 1
          %s832 = smul.addr %s831, 192
          %s833 = scalar_lea.vmem [#allocation9], %s832
          %834 = dma.done %s830, 3072
        $region64: #{tpu_custom_call.1} parent=59 // pred_fallthru
          _
      $region60: #{tpu_custom_call.1} parent=5 // pred_fallthru
        _
    $region6: #{tpu_custom_call.1} parent=1 // loop_footer
      %s20 = sadd.s32 1, %s16
    $region7: #{tpu_custom_call.1} parent=1 // loop_footer_branch
      %15 = sbr.rel target = $region3
    $region8: #{tpu_custom_call.1} parent=1 // loop_exit
      _
    %835 = vsyncpa [#allocation4], 1
    %s836 = scalar_lea.sflag [#allocation4], 1
    %837 = vsyncpa %s836, 1
    %838 = vsyncpa [#allocation7], 1
    %s839 = scalar_lea.sflag [#allocation7], 1
    %840 = vsyncpa %s839, 1
    %841 = vsyncpa [#allocation5], 1
    %s842 = scalar_lea.sflag [#allocation5], 1
    %843 = vsyncpa %s842, 1

</llo_original>
